<compile_context>
chip_gen: v7x
topology: tpu7x:2x2x1
jax: 0.10.0
libtpu: 0.0.40
codegen_flags: <defaults>
</compile_context>

<pallas_src>
import functools

import jax
import jax.numpy as jnp
from jax.experimental import pallas as pl
from jax.experimental.pallas import tpu as pltpu

EPS = 1e-9

# Keep the double-buffered (5, tb, D) input block comfortably inside the scoped
# VMEM defaults on every generation (16 MiB v5e, 32 MiB v6e/v7x; 64 MiB phys v7x).
_VMEM_INPUT_BUDGET = 8 * 1024 * 1024


def _loss_kernel(x_ref, out_ref, *, b, tb, blocks_per_part, needs_mask):
    # Grid: (partition ["parallel"], row-tile within partition ["arbitrary"]).
    c = pl.program_id(0)
    i = pl.program_id(1)

    # Per-partition accumulator lives in the resident output block.
    @pl.when(i == 0)
    def _():
        out_ref[...] = jnp.zeros_like(out_ref)

    # The five chunks of this row tile; cast to f32 on the VPU (inputs may be bf16).
    r  = x_ref[0].astype(jnp.float32)   # reference embeddings   (tb, D)
    p1 = x_ref[1].astype(jnp.float32)   # positives (first half)
    p2 = x_ref[2].astype(jnp.float32)   # positives (second half)
    n1 = x_ref[3].astype(jnp.float32)   # negatives (first half)
    n2 = x_ref[4].astype(jnp.float32)   # negatives (second half)

    def log_dist(a, o):
        diff = a - o
        ssq = jnp.sum(diff * diff, axis=-1, keepdims=True)      # (tb, 1)
        # Parity with the reference: dist = ||a-o||_2 + eps, then log.
        return jnp.log(jnp.sqrt(ssq) + EPS)

    term = (log_dist(r, p1) + log_dist(r, p2)
            - log_dist(r, n1) - log_dist(r, n2))                # (tb, 1)

    if needs_mask:
        # Rows past B (partial last tile, or a clamped out-of-range tile when the
        # block count does not divide evenly across partitions) contribute 0.
        row0 = (c * blocks_per_part + i) * tb
        rows = jax.lax.broadcasted_iota(jnp.int32, (tb, 1), 0)
        term = jnp.where(row0 + rows < b, term, 0.0)

    out_ref[...] += term[None, :, :]

    # TODO(synk): the PyTorch _sanity_check uses host-side asserts (isnan / <=0
    # counts); runtime asserts have no clean Pallas equivalent and are omitted.


def contrastive_loss(local_emb, *, row_tile=512, n_partitions=None):
    """local_emb: [5*B, D] float array (f32 or bf16). Returns scalar loss (f32)."""
    total_rows, d = local_emb.shape
    assert total_rows % 5 == 0, "leading dim must be divisible by 5"
    assert row_tile >= 8 and row_tile % 8 == 0, "row_tile must be a multiple of 8"
    b = total_rows // 5

    # Free, contiguous reshape — replaces the split/repeat/concat HBM round trip.
    x = local_emb.reshape(5, b, d)

    # Row tile: full B when small, otherwise a multiple of 8 sized so that the
    # double-buffered (5, tb, d) input block stays inside the VMEM budget
    # (re-derived from D / dtype, so it also fits v7x's 64 MiB physical VMEM).
    itemsize = jnp.dtype(local_emb.dtype).itemsize
    budget_tb = _VMEM_INPUT_BUDGET // (2 * 5 * d * itemsize)
    budget_tb = max(8, (budget_tb // 8) * 8)
    tile = min(row_tile, budget_tb)
    tb = b if b <= tile else tile
    n_row_blocks = pl.cdiv(b, tb)

    # Split row tiles across TensorCores (v7x has 2 per chip; the extra size-1 or
    # size-2 "parallel" axis is harmless on single-core v5e/v6e).
    if n_partitions is None:
        n_partitions = 2 if n_row_blocks >= 2 else 1
    blocks_per_part = pl.cdiv(n_row_blocks, n_partitions)

    needs_mask = (tb * n_row_blocks != b) or \
                 (n_partitions * blocks_per_part != n_row_blocks)

    def x_index_map(c, i):
        # Clamp so a fully out-of-range tile re-reads a valid tile; its rows are
        # masked out inside the kernel.
        return (0, jnp.minimum(c * blocks_per_part + i, n_row_blocks - 1), 0)

    kernel = functools.partial(
        _loss_kernel, b=b, tb=tb, blocks_per_part=blocks_per_part,
        needs_mask=needs_mask)

    partial_sums = pl.pallas_call(
        kernel,
        out_shape=jax.ShapeDtypeStruct((n_partitions, tb, 1), jnp.float32),
        grid=(n_partitions, blocks_per_part),
        in_specs=[pl.BlockSpec((5, tb, d), x_index_map)],
        out_specs=pl.BlockSpec((1, tb, 1), lambda c, i: (c, 0, 0)),
        compiler_params=pltpu.CompilerParams(
            dimension_semantics=("parallel", "arbitrary")),
    )(x)

    # Tiny finalize: sum the per-partition / per-row partials and scale by the
    # compile-time constant 1/(2B) (replaces the runtime mean divide).
    return jnp.sum(partial_sums) * (1.0 / (2.0 * b))


def _reference_loss(local_emb):
    c0, c1, c2, c3, c4 = jnp.split(local_emb, 5, axis=0)
    ref = jnp.concatenate([c0, c0], axis=0)
    pos = jnp.concatenate([c1, c2], axis=0)
    neg = jnp.concatenate([c3, c4], axis=0)
    dp = jnp.sqrt(jnp.sum((ref - pos) ** 2, axis=-1)) + EPS
    dn = jnp.sqrt(jnp.sum((ref - neg) ** 2, axis=-1)) + EPS
    return jnp.mean(jnp.log(dp) - jnp.log(dn))


if __name__ == "__main__":
    key0, key1 = jax.random.split(jax.random.PRNGKey(0))

    # Small shape consistent with the module: 5 chunks of B rows of D-dim embeddings.
    B, D = 2, 32
    local_emb = jax.random.normal(key0, (5 * B, D), dtype=jnp.float32)

    loss = jax.block_until_ready(contrastive_loss(local_emb))
    ref = jax.block_until_ready(_reference_loss(local_emb))
    assert jnp.isfinite(loss), f"non-finite loss: {loss}"
    assert abs(float(loss) - float(ref)) < 1e-5, (float(loss), float(ref))

    # Also exercise the tiled / 2-partition / masked-tail path (still small).
    B2, D2 = 20, 128
    local_emb2 = jax.random.normal(key1, (5 * B2, D2), dtype=jnp.float32)
    loss2 = jax.block_until_ready(contrastive_loss(local_emb2, row_tile=8))
    ref2 = jax.block_until_ready(_reference_loss(local_emb2))
    assert jnp.isfinite(loss2), f"non-finite loss: {loss2}"
    assert abs(float(loss2) - float(ref2)) < 1e-4, (float(loss2), float(ref2))

    print("KERNEL_OK")
</pallas_src>

<mosaic_0001>
module attributes {stable_mosaic.version = 11 : i64} {
  func.func @_loss_kernel(%arg0: i32, %arg1: i32, %arg2: memref<5x2x32xf32, #tpu.memory_space<vmem>>, %arg3: memref<1x2x1xf32, #tpu.memory_space<vmem>>) attributes {dimension_semantics = [#tpu.dimension_semantics<parallel>, #tpu.dimension_semantics<arbitrary>], iteration_bounds = array<i64: 1, 1>, scalar_prefetch = 0 : i64, scratch_operands = 0 : i64, tpu.core_type = #tpu.core_type<tc>, window_params = [{transform_indices = @transform_0, window_bounds = array<i64: 5, 2, 32>}, {transform_indices = @transform_1, window_bounds = array<i64: 1, 2, 1>}]} {
    %c0_i32 = arith.constant 0 : i32
    %0 = arith.cmpi eq, %arg1, %c0_i32 : i32
    %1 = arith.extui %0 : i1 to i32
    %c0_i32_0 = arith.constant 0 : i32
    %2 = arith.cmpi ne, %1, %c0_i32_0 : i32
    scf.if %2 {
      %cst_24 = arith.constant 0.000000e+00 : f32
      %52 = vector.broadcast %cst_24 : f32 to vector<1x2x1xf32>
      %c0_25 = arith.constant 0 : index
      %c0_26 = arith.constant 0 : index
      %c0_27 = arith.constant 0 : index
      %53 = vector.load %arg3[%c0_25, %c0_26, %c0_27] : memref<1x2x1xf32, #tpu.memory_space<vmem>>, vector<1x2x1xf32>
      tpu.vector_store %arg3[%c0_25, %c0_26, %c0_27], %52 {strides = array<i32>} : memref<1x2x1xf32, #tpu.memory_space<vmem>>, vector<1x2x1xf32>,
    } else {
    }
    %c0 = arith.constant 0 : index
    %c0_1 = arith.constant 0 : index
    %c0_2 = arith.constant 0 : index
    %3 = vector.load %arg2[%c0, %c0_1, %c0_2] : memref<5x2x32xf32, #tpu.memory_space<vmem>>, vector<1x2x32xf32>
    %4 = vector.shape_cast %3 : vector<1x2x32xf32> to vector<2x32xf32>
    %c1 = arith.constant 1 : index
    %c0_3 = arith.constant 0 : index
    %c0_4 = arith.constant 0 : index
    %5 = vector.load %arg2[%c1, %c0_3, %c0_4] : memref<5x2x32xf32, #tpu.memory_space<vmem>>, vector<1x2x32xf32>
    %6 = vector.shape_cast %5 : vector<1x2x32xf32> to vector<2x32xf32>
    %c2 = arith.constant 2 : index
    %c0_5 = arith.constant 0 : index
    %c0_6 = arith.constant 0 : index
    %7 = vector.load %arg2[%c2, %c0_5, %c0_6] : memref<5x2x32xf32, #tpu.memory_space<vmem>>, vector<1x2x32xf32>
    %8 = vector.shape_cast %7 : vector<1x2x32xf32> to vector<2x32xf32>
    %c3 = arith.constant 3 : index
    %c0_7 = arith.constant 0 : index
    %c0_8 = arith.constant 0 : index
    %9 = vector.load %arg2[%c3, %c0_7, %c0_8] : memref<5x2x32xf32, #tpu.memory_space<vmem>>, vector<1x2x32xf32>
    %10 = vector.shape_cast %9 : vector<1x2x32xf32> to vector<2x32xf32>
    %c4 = arith.constant 4 : index
    %c0_9 = arith.constant 0 : index
    %c0_10 = arith.constant 0 : index
    %11 = vector.load %arg2[%c4, %c0_9, %c0_10] : memref<5x2x32xf32, #tpu.memory_space<vmem>>, vector<1x2x32xf32>
    %12 = vector.shape_cast %11 : vector<1x2x32xf32> to vector<2x32xf32>
    %13 = arith.subf %4, %6 : vector<2x32xf32>
    %14 = arith.mulf %13, %13 : vector<2x32xf32>
    %cst = arith.constant dense<0.000000e+00> : vector<2xf32>
    %15 = vector.multi_reduction <add>, %14, %cst [1] : vector<2x32xf32> to vector<2xf32>
    %16 = vector.shape_cast %15 : vector<2xf32> to vector<2x1xf32>
    %17 = math.sqrt %16 : vector<2x1xf32>
    %cst_11 = arith.constant 9.99999971E-10 : f32
    %18 = vector.broadcast %cst_11 : f32 to vector<2x1xf32>
    %19 = arith.addf %17, %18 : vector<2x1xf32>
    %20 = math.log %19 : vector<2x1xf32>
    %21 = arith.subf %4, %8 : vector<2x32xf32>
    %22 = arith.mulf %21, %21 : vector<2x32xf32>
    %cst_12 = arith.constant dense<0.000000e+00> : vector<2xf32>
    %23 = vector.multi_reduction <add>, %22, %cst_12 [1] : vector<2x32xf32> to vector<2xf32>
    %24 = vector.shape_cast %23 : vector<2xf32> to vector<2x1xf32>
    %25 = math.sqrt %24 : vector<2x1xf32>
    %cst_13 = arith.constant 9.99999971E-10 : f32
    %26 = vector.broadcast %cst_13 : f32 to vector<2x1xf32>
    %27 = arith.addf %25, %26 : vector<2x1xf32>
    %28 = math.log %27 : vector<2x1xf32>
    %29 = arith.addf %20, %28 : vector<2x1xf32>
    %30 = arith.subf %4, %10 : vector<2x32xf32>
    %31 = arith.mulf %30, %30 : vector<2x32xf32>
    %cst_14 = arith.constant dense<0.000000e+00> : vector<2xf32>
    %32 = vector.multi_reduction <add>, %31, %cst_14 [1] : vector<2x32xf32> to vector<2xf32>
    %33 = vector.shape_cast %32 : vector<2xf32> to vector<2x1xf32>
    %34 = math.sqrt %33 : vector<2x1xf32>
    %cst_15 = arith.constant 9.99999971E-10 : f32
    %35 = vector.broadcast %cst_15 : f32 to vector<2x1xf32>
    %36 = arith.addf %34, %35 : vector<2x1xf32>
    %37 = math.log %36 : vector<2x1xf32>
    %38 = arith.subf %29, %37 : vector<2x1xf32>
    %39 = arith.subf %4, %12 : vector<2x32xf32>
    %40 = arith.mulf %39, %39 : vector<2x32xf32>
    %cst_16 = arith.constant dense<0.000000e+00> : vector<2xf32>
    %41 = vector.multi_reduction <add>, %40, %cst_16 [1] : vector<2x32xf32> to vector<2xf32>
    %42 = vector.shape_cast %41 : vector<2xf32> to vector<2x1xf32>
    %43 = math.sqrt %42 : vector<2x1xf32>
    %cst_17 = arith.constant 9.99999971E-10 : f32
    %44 = vector.broadcast %cst_17 : f32 to vector<2x1xf32>
    %45 = arith.addf %43, %44 : vector<2x1xf32>
    %46 = math.log %45 : vector<2x1xf32>
    %47 = arith.subf %38, %46 : vector<2x1xf32>
    %c0_18 = arith.constant 0 : index
    %c0_19 = arith.constant 0 : index
    %c0_20 = arith.constant 0 : index
    %48 = vector.load %arg3[%c0_18, %c0_19, %c0_20] : memref<1x2x1xf32, #tpu.memory_space<vmem>>, vector<1x2x1xf32>
    %49 = vector.shape_cast %47 : vector<2x1xf32> to vector<1x2x1xf32>
    %50 = arith.addf %48, %49 : vector<1x2x1xf32>
    %c0_21 = arith.constant 0 : index
    %c0_22 = arith.constant 0 : index
    %c0_23 = arith.constant 0 : index
    %51 = vector.load %arg3[%c0_21, %c0_22, %c0_23] : memref<1x2x1xf32, #tpu.memory_space<vmem>>, vector<1x2x1xf32>
    tpu.vector_store %arg3[%c0_21, %c0_22, %c0_23], %50 {strides = array<i32>} : memref<1x2x1xf32, #tpu.memory_space<vmem>>, vector<1x2x1xf32>,
    return
  }
  func.func @transform_0(%arg0: i32, %arg1: i32) -> (i32, i32, i32) {
    %c1_i32 = arith.constant 1 : i32
    %0 = arith.muli %arg0, %c1_i32 : i32
    %1 = arith.addi %0, %arg1 : i32
    %c0_i32 = arith.constant 0 : i32
    %2 = arith.minsi %1, %c0_i32 : i32
    %c0_i32_0 = arith.constant 0 : i32
    %c0_i32_1 = arith.constant 0 : i32
    %c0_i32_2 = arith.constant 0 : i32
    return %c0_i32_0, %2, %c0_i32_1 : i32, i32, i32
  }
  func.func @transform_1(%arg0: i32, %arg1: i32) -> (i32, i32, i32) {
    %c0_i32 = arith.constant 0 : i32
    %c0_i32_0 = arith.constant 0 : i32
    %c0_i32_1 = arith.constant 0 : i32
    return %arg0, %c0_i32, %c0_i32_0 : i32, i32, i32
  }
}

</mosaic_0001>

<llo_original>
// kernel: tpu_custom_call.1
$region0: #{tpu_custom_call.1}
  #allocation0 [shape = 'u32[]', space=smem, size = 0x4, offset = 0x4, fixed_abs, tag = 'smem constant byte address 0x4 - core index']
  #allocation1 [shape = 'u32[144,128]{1,0:T(1,128)}', space=vmem, size = 0x12000, scoped, tag = 'internal scratch']
  %s0 = inlined_call_operand.hbm [shape: f32[5,2,32], index: 0, kind: input, shape index: {}]
  %s1 = inlined_call_operand.vmem [shape: f32[1,2,1], index: 1, kind: output, shape index: {}]
  %s2 = sld [smem:[#allocation0]]
  $region22: #{tpu_custom_call.1} parent=0
    _
  %s4 = ssub.s32 1, %s2
  %s5 = scalar_select 0, %s4, %s2
  $region1: #{tpu_custom_call.1} parent=0
    #allocation2 [shape = 'u8[5120]{0}', space=vmem, size = 0x1400, scoped, tag = 'input window, operand 0, single buffered']
    #allocation3 [shape = 's32[1]{0}', space=sflag, size = 0x4, scoped, tag = 'scoped memory for tpu_custom_call.1']
    %6 = vsyncpa [#allocation3], 0
    // Predicated region
    $region2: #{tpu_custom_call.1} parent=1 // pred_check
      _
    $region3: #{tpu_custom_call.1} parent=1 // pred_check_branch
      %8 = sbr.rel (0) target = $region5
    $region4: #{tpu_custom_call.1} parent=1 // pred_region
      %s9 = sadd.s32 0, 0
      %p10 = scmp.lt.s32.totalorder %s9, 0
      %s11 = scalar_select %p10, %s9, 0
      %s13 = ssub.s32 160, 160
      %14 = vsyncadd [#allocation3], %s13
      %s15 = smul.addr %s11, 32
      %s16 = scalar_lea.hbm %s0, %s15
      %s17 = sshll.u32 [#allocation2], 4
      %s18 = int_to_ptr.vmem [resolvable:$true] %s17
      %23 = dma.hbm_to_vmem [thread:$0]  %s16, 160, %s18, [#allocation3], 32, 32, 2
    $region5: #{tpu_custom_call.1} parent=1 // pred_fallthru
      _
    // Predicated region
    $region6: #{tpu_custom_call.1} parent=1 // pred_check
      _
    $region7: #{tpu_custom_call.1} parent=1 // pred_check_branch
      %25 = sbr.rel (0) target = $region9
    $region8: #{tpu_custom_call.1} parent=1 // pred_region
      %26 = dma.done [#allocation3], 160
    $region9: #{tpu_custom_call.1} parent=1 // pred_fallthru
      _
    %s27 = sadd.s32 0, 0
    %p28 = scmp.lt.s32.totalorder %s27, 0
    %s29 = scalar_select %p28, %s27, 0
    %p30 = scmp.eq.s32.totalorder 0, 0
    // Predicated region
    $region10: #{tpu_custom_call.1} parent=1 // pred_check
      %p31 = pneg %p30
    $region11: #{tpu_custom_call.1} parent=1 // pred_check_branch
      %33 = sbr.rel (%p31) target = $region13
    $region12: #{tpu_custom_call.1} parent=1 // pred_region
      %vm34 = vcmask 1024
      %35 = vst.msk [vmem:[%s1] sm:$0x3] %vm34, 0.0
    $region13: #{tpu_custom_call.1} parent=1 // pred_fallthru
      _
    %v36 = vld [vmem:[#allocation2] sm:$0x3]
    %s37 = scalar_lea.vmem [#allocation2], 2
    %v38 = vld [vmem:[%s37] sm:$0x3]
    %s39 = scalar_lea.vmem [#allocation2], 4
    %v40 = vld [vmem:[%s39] sm:$0x3]
    %s41 = scalar_lea.vmem [#allocation2], 6
    %v42 = vld [vmem:[%s41] sm:$0x3]
    %s43 = scalar_lea.vmem [#allocation2], 8
    %v44 = vld [vmem:[%s43] sm:$0x3]
    %v45 = vsub.f32 %v36, %v38
    %v46 = vmul.f32 %v45, %v45
    %vm47 = vcmask 254976
    %v48 = vsel %vm47, %v46, 0.0
    %49 = vadd.xlane.f32.xlu0 %v48
    %v50 = vpop.xlane.xlu0 %49
    %v51 = vrsqrt.pop %v50
    %v52 = vmul.f32 %v50, %v51
    %vm53 = vcmp.eq.f32.partialorder %v50, inf
    %v54 = vsel %vm53, %v50, %v52
    %vm55 = vcmp.eq.f32.partialorder %v50, 0.0
    %v56 = vand.u32 %v50, 2147483648
    %v57 = vsel %vm55, %v56, %v54
    %v58 = vadd.f32 %v57, 1e-09
    %v59 = vlog2.pop %v58
    %v60 = vmul.f32 %v59, 0.6931472
    %v61 = vsub.f32 %v36, %v40
    %v62 = vmul.f32 %v61, %v61
    %v63 = vsel %vm47, %v62, 0.0
    %64 = vadd.xlane.f32.xlu0 %v63
    %v65 = vpop.xlane.xlu0 %64
    %v66 = vrsqrt.pop %v65
    %v67 = vmul.f32 %v65, %v66
    %vm68 = vcmp.eq.f32.partialorder %v65, inf
    %v69 = vsel %vm68, %v65, %v67
    %vm70 = vcmp.eq.f32.partialorder %v65, 0.0
    %v71 = vand.u32 %v65, 2147483648
    %v72 = vsel %vm70, %v71, %v69
    %v73 = vadd.f32 %v72, 1e-09
    %v74 = vlog2.pop %v73
    %v75 = vmul.f32 %v74, 0.6931472
    %v76 = vadd.f32 %v60, %v75
    %v77 = vsub.f32 %v36, %v42
    %v78 = vmul.f32 %v77, %v77
    %v79 = vsel %vm47, %v78, 0.0
    %80 = vadd.xlane.f32.xlu0 %v79
    %v81 = vpop.xlane.xlu0 %80
    %v82 = vrsqrt.pop %v81
    %v83 = vmul.f32 %v81, %v82
    %vm84 = vcmp.eq.f32.partialorder %v81, inf
    %v85 = vsel %vm84, %v81, %v83
    %vm86 = vcmp.eq.f32.partialorder %v81, 0.0
    %v87 = vand.u32 %v81, 2147483648
    %v88 = vsel %vm86, %v87, %v85
    %v89 = vadd.f32 %v88, 1e-09
    %v90 = vlog2.pop %v89
    %v91 = vmul.f32 %v90, 0.6931472
    %v92 = vsub.f32 %v76, %v91
    %v93 = vsub.f32 %v36, %v44
    %v94 = vmul.f32 %v93, %v93
    %v95 = vsel %vm47, %v94, 0.0
    %96 = vadd.xlane.f32.xlu0 %v95
    %v97 = vpop.xlane.xlu0 %96
    %v98 = vrsqrt.pop %v97
    %v99 = vmul.f32 %v97, %v98
    %vm100 = vcmp.eq.f32.partialorder %v97, inf
    %v101 = vsel %vm100, %v97, %v99
    %vm102 = vcmp.eq.f32.partialorder %v97, 0.0
    %v103 = vand.u32 %v97, 2147483648
    %v104 = vsel %vm102, %v103, %v101
    %v105 = vadd.f32 %v104, 1e-09
    %v106 = vlog2.pop %v105
    %v107 = vmul.f32 %v106, 0.6931472
    %v108 = vsub.f32 %v92, %v107
    %v109 = vld [vmem:[%s1] sm:$0x3]
    %v110 = vadd.f32 %v109, %v108
    %vm111 = vcmask 1024
    %112 = vst.msk [vmem:[%s1] sm:$0x3] %vm111, %v110
    // Predicated region
    $region14: #{tpu_custom_call.1} parent=1 // pred_check
      _
    $region15: #{tpu_custom_call.1} parent=1 // pred_check_branch
      %114 = sbr.rel (0) target = $region17
    $region16: #{tpu_custom_call.1} parent=1 // pred_region
      _
    $region17: #{tpu_custom_call.1} parent=1 // pred_fallthru
      _
    // Predicated region
    $region18: #{tpu_custom_call.1} parent=1 // pred_check
      _
    $region19: #{tpu_custom_call.1} parent=1 // pred_check_branch
      %116 = sbr.rel (0) target = $region21
    $region20: #{tpu_custom_call.1} parent=1 // pred_region
      _
    $region21: #{tpu_custom_call.1} parent=1 // pred_fallthru
      _
    %117 = vsyncpa [#allocation3], 1

</llo_original>
